<compile_context>
chip_gen: v7x
topology: tpu7x:2x2x1
jax: 0.10.0
libtpu: 0.0.40
codegen_flags: <defaults>
</compile_context>

<pallas_src>
import functools

import jax
import jax.numpy as jnp
import numpy as np
from jax import lax
from jax.experimental import pallas as pl
from jax.experimental.pallas import tpu as pltpu


def _conv_stats_kernel(col_ref, w_ref, b_ref, out_ref, sum_ref, sq_ref):
    # col_ref: (K_pad, TS) im2col tile   w_ref: (Cout, K_pad)   b_ref: (Cout, 1)
    # out_ref: (Cout, TS) conv + bias tile (lane-dense store)
    # sum_ref / sq_ref: (Cout, 1) per-channel stats, accumulated across spatial tiles.
    acc = jnp.dot(w_ref[...], col_ref[...], preferred_element_type=jnp.float32)
    acc = acc + b_ref[...]
    out_ref[...] = acc

    @pl.when(pl.program_id(1) == 0)
    def _():
        sum_ref[...] = jnp.zeros_like(sum_ref)
        sq_ref[...] = jnp.zeros_like(sq_ref)

    sum_ref[...] += jnp.sum(acc, axis=1, keepdims=True)
    sq_ref[...] += jnp.sum(acc * acc, axis=1, keepdims=True)


def _scale_shift_relu_kernel(y_ref, scale_ref, shift_ref, o_ref):
    # y_ref: (Cout, TS); scale/shift: (Cout, 1).  GroupNorm affine + ReLU, lane-dense.
    o_ref[...] = jnp.maximum(y_ref[...] * scale_ref[...] + shift_ref[...], 0.0)


def _spatial_tile(S, max_tile=2048):
    """Largest multiple-of-128 divisor of S (<= max_tile); full extent if S % 128 != 0."""
    if S % 128 != 0:
        return S
    cand = max_tile
    while cand >= 128:
        if S % cand == 0:
            return cand
        cand -= 128
    return 128


def _im2col_3x3x3(x_ncdhw):
    """x: (N, Cin, D, H, W) -> (N, 27*Cin, D*H*W), tap-major / cin-minor row order."""
    N, Cin, D, H, W = x_ncdhw.shape
    xp = jnp.pad(x_ncdhw, ((0, 0), (0, 0), (1, 1), (1, 1), (1, 1)))
    taps = []
    for kd in range(3):
        for kh in range(3):
            for kw in range(3):
                taps.append(
                    xp[:, :, kd:kd + D, kh:kh + H, kw:kw + W].reshape(N, Cin, D * H * W))
    col = jnp.stack(taps, axis=1)                    # (N, 27, Cin, S)
    return col.reshape(N, 27 * Cin, D * H * W)


@functools.partial(jax.jit, static_argnames=("num_groups", "eps"))
def decoder_conv(x, w_pt, b, gamma, beta, *, num_groups, eps=1e-5):
    """x: (N, Cin, D, H, W) NCDHW (PyTorch layout); w_pt: (Cout, Cin, 3, 3, 3).
    Returns (N, Cout, D, H, W) = relu(groupnorm(conv3d(x)))."""
    N, Cin, D, H, W = x.shape
    Cout = w_pt.shape[0]
    Cg = Cout // num_groups
    S = D * H * W
    K = 27 * Cin
    K_pad = ((K + 127) // 128) * 128                 # pad contraction dim for aligned loads
    TS = _spatial_tile(S)
    nS = S // TS

    x = x.astype(jnp.float32)
    col = _im2col_3x3x3(x)                                        # (N, K, S)
    col = jnp.pad(col, ((0, 0), (0, K_pad - K), (0, 0)))          # zero-pad K
    w2 = jnp.transpose(w_pt, (0, 2, 3, 4, 1)).reshape(Cout, K).astype(jnp.float32)
    w2 = jnp.pad(w2, ((0, 0), (0, K_pad - K)))                    # (Cout, K_pad)
    b2 = b.reshape(Cout, 1).astype(jnp.float32)

    # Pass 1: fused 27-tap conv (single K=K_pad matmul) + bias + per-channel stats.
    conv_out, ch_sum, ch_sq = pl.pallas_call(
        _conv_stats_kernel,
        out_shape=(
            jax.ShapeDtypeStruct((N, Cout, S), jnp.float32),
            jax.ShapeDtypeStruct((N, Cout, 1), jnp.float32),
            jax.ShapeDtypeStruct((N, Cout, 1), jnp.float32),
        ),
        grid_spec=pltpu.PrefetchScalarGridSpec(
            num_scalar_prefetch=0,
            grid=(N, nS),
            in_specs=[
                pl.BlockSpec((None, K_pad, TS), lambda n, j: (n, 0, j)),
                pl.BlockSpec((Cout, K_pad), lambda n, j: (0, 0)),
                pl.BlockSpec((Cout, 1), lambda n, j: (0, 0)),
            ],
            out_specs=[
                pl.BlockSpec((None, Cout, TS), lambda n, j: (n, 0, j)),
                pl.BlockSpec((None, Cout, 1), lambda n, j: (n, 0, 0)),
                pl.BlockSpec((None, Cout, 1), lambda n, j: (n, 0, 0)),
            ],
        ),
        compiler_params=pltpu.CompilerParams(
            dimension_semantics=("parallel", "arbitrary"),
            vmem_limit_bytes=32 * 1024 * 1024,
        ),
    )(col, w2, b2)

    # Tiny XLA glue (O(N*Cout)): per-group stats -> per-channel GroupNorm scale/shift.
    sums = ch_sum[:, :, 0].reshape(N, num_groups, Cg).sum(axis=2)   # (N, G)
    sqs = ch_sq[:, :, 0].reshape(N, num_groups, Cg).sum(axis=2)     # (N, G)
    cnt = float(S * Cg)
    mean_g = sums / cnt
    var_g = sqs / cnt - mean_g * mean_g                             # biased, like torch
    inv_g = lax.rsqrt(var_g + eps)
    mean_c = jnp.repeat(mean_g, Cg, axis=1)                         # (N, Cout)
    inv_c = jnp.repeat(inv_g, Cg, axis=1)
    g32 = gamma.astype(jnp.float32)[None, :]
    scale = (inv_c * g32).reshape(N, Cout, 1)
    shift = (beta.astype(jnp.float32)[None, :] - mean_c * inv_c * g32).reshape(N, Cout, 1)

    # Pass 2: normalize (per-channel scale/shift) + ReLU, tile-by-tile.
    y = pl.pallas_call(
        _scale_shift_relu_kernel,
        out_shape=jax.ShapeDtypeStruct((N, Cout, S), jnp.float32),
        grid_spec=pltpu.PrefetchScalarGridSpec(
            num_scalar_prefetch=0,
            grid=(N, nS),
            in_specs=[
                pl.BlockSpec((None, Cout, TS), lambda n, j: (n, 0, j)),
                pl.BlockSpec((None, Cout, 1), lambda n, j: (n, 0, 0)),
                pl.BlockSpec((None, Cout, 1), lambda n, j: (n, 0, 0)),
            ],
            out_specs=pl.BlockSpec((None, Cout, TS), lambda n, j: (n, 0, j)),
        ),
        compiler_params=pltpu.CompilerParams(
            dimension_semantics=("parallel", "parallel"),
            vmem_limit_bytes=32 * 1024 * 1024,
        ),
    )(conv_out, scale, shift)

    return y.reshape(N, Cout, D, H, W)


def reference(x, w_pt, b, gamma, beta, num_groups, eps=1e-5):
    """Pure-JAX reference matching torch Conv3d + GroupNorm + ReLU (NCDHW layout)."""
    out = lax.conv_general_dilated(
        x.astype(jnp.float32), w_pt.astype(jnp.float32),
        window_strides=(1, 1, 1), padding=((1, 1), (1, 1), (1, 1)),
        dimension_numbers=('NCDHW', 'OIDHW', 'NCDHW'),
        precision=lax.Precision.HIGHEST)
    out = out + b.reshape(1, -1, 1, 1, 1)
    N, C, D, H, W = out.shape
    Cg = C // num_groups
    o = out.reshape(N, num_groups, Cg, D, H, W)
    mean = o.mean(axis=(2, 3, 4, 5), keepdims=True)
    var = o.var(axis=(2, 3, 4, 5), keepdims=True)     # biased, like torch GroupNorm
    o = (o - mean) / jnp.sqrt(var + eps)
    o = o.reshape(N, C, D, H, W) * gamma.reshape(1, -1, 1, 1, 1) + beta.reshape(1, -1, 1, 1, 1)
    return jnp.maximum(o, 0.0)


if __name__ == "__main__":
    # Small shapes consistent with the module: in_ch=4, out_ch=8 (out_ch//4 = 2 groups).
    N, Cin, Cout, D, H, W = 2, 4, 8, 8, 8, 8
    num_groups = Cout // 4
    key = jax.random.PRNGKey(0)
    k1, k2, k3, k4, k5 = jax.random.split(key, 5)

    x = jax.random.normal(k1, (N, Cin, D, H, W), jnp.float32)          # PyTorch NCDHW
    w_pt = 0.1 * jax.random.normal(k2, (Cout, Cin, 3, 3, 3), jnp.float32)
    b = 0.1 * jax.random.normal(k3, (Cout,), jnp.float32)
    gamma = 1.0 + 0.1 * jax.random.normal(k4, (Cout,), jnp.float32)
    beta = 0.1 * jax.random.normal(k5, (Cout,), jnp.float32)

    out = decoder_conv(x, w_pt, b, gamma, beta, num_groups=num_groups)
    out = jax.block_until_ready(out)

    ref = reference(x, w_pt, b, gamma, beta, num_groups)
    np.testing.assert_allclose(np.asarray(out), np.asarray(ref), rtol=2e-4, atol=2e-4)

    print("KERNEL_OK")
</pallas_src>

<mosaic_0001>
module attributes {stable_mosaic.version = 11 : i64} {
  func.func @_conv_stats_kernel(%arg0: i32, %arg1: i32, %arg2: memref<1x128x512xf32, #tpu.memory_space<vmem>>, %arg3: memref<8x128xf32, #tpu.memory_space<vmem>>, %arg4: memref<8x1xf32, #tpu.memory_space<vmem>>, %arg5: memref<1x8x512xf32, #tpu.memory_space<vmem>>, %arg6: memref<1x8x1xf32, #tpu.memory_space<vmem>>, %arg7: memref<1x8x1xf32, #tpu.memory_space<vmem>>) attributes {dimension_semantics = [#tpu.dimension_semantics<parallel>, #tpu.dimension_semantics<arbitrary>], iteration_bounds = array<i64: 2, 1>, scalar_prefetch = 0 : i64, scratch_operands = 0 : i64, tpu.core_type = #tpu.core_type<tc>, window_params = [{transform_indices = @transform_0, window_bounds = array<i64: 1, 128, 512>}, {pipeline_mode = #tpu.pipeline_mode<synchronous>, transform_indices = @transform_1, window_bounds = array<i64: 8, 128>}, {pipeline_mode = #tpu.pipeline_mode<synchronous>, transform_indices = @transform_2, window_bounds = array<i64: 8, 1>}, {transform_indices = @transform_3, window_bounds = array<i64: 1, 8, 512>}, {transform_indices = @transform_4, window_bounds = array<i64: 1, 8, 1>}, {transform_indices = @transform_5, window_bounds = array<i64: 1, 8, 1>}]} {
    %c0 = arith.constant 0 : index
    %c0_0 = arith.constant 0 : index
    %0 = vector.load %arg3[%c0, %c0_0] : memref<8x128xf32, #tpu.memory_space<vmem>>, vector<8x128xf32>
    %c0_1 = arith.constant 0 : index
    %c0_2 = arith.constant 0 : index
    %c0_3 = arith.constant 0 : index
    %1 = vector.load %arg2[%c0_1, %c0_2, %c0_3] : memref<1x128x512xf32, #tpu.memory_space<vmem>>, vector<1x128x512xf32>
    %2 = vector.shape_cast %1 : vector<1x128x512xf32> to vector<128x512xf32>
    %cst = arith.constant dense<0.000000e+00> : vector<8x512xf32>
    %3 = tpu.matmul %0, %2, %cst {dimension_numbers = #tpu.dot_dimension_numbers<[1], [0], [0], [1], [0, 0, 1, 1], [], []>} : vector<8x128xf32>, vector<128x512xf32>, vector<8x512xf32> -> vector<8x512xf32>
    %c0_4 = arith.constant 0 : index
    %c0_5 = arith.constant 0 : index
    %4 = vector.load %arg4[%c0_4, %c0_5] : memref<8x1xf32, #tpu.memory_space<vmem>>, vector<8x1xf32>
    %5 = vector.broadcast %4 : vector<8x1xf32> to vector<8x512xf32>
    %6 = arith.addf %3, %5 : vector<8x512xf32>
    %c0_6 = arith.constant 0 : index
    %c0_7 = arith.constant 0 : index
    %c0_8 = arith.constant 0 : index
    %7 = vector.load %arg5[%c0_6, %c0_7, %c0_8] : memref<1x8x512xf32, #tpu.memory_space<vmem>>, vector<1x8x512xf32>
    %8 = vector.shape_cast %7 : vector<1x8x512xf32> to vector<8x512xf32>
    %9 = vector.shape_cast %6 : vector<8x512xf32> to vector<1x8x512xf32>
    tpu.vector_store %arg5[%c0_6, %c0_7, %c0_8], %9 {strides = array<i32>} : memref<1x8x512xf32, #tpu.memory_space<vmem>>, vector<1x8x512xf32>,
    %c0_i32 = arith.constant 0 : i32
    %10 = arith.cmpi eq, %arg1, %c0_i32 : i32
    %11 = arith.extui %10 : i1 to i32
    %c0_i32_9 = arith.constant 0 : i32
    %12 = arith.cmpi ne, %11, %c0_i32_9 : i32
    scf.if %12 {
      %cst_24 = arith.constant 0.000000e+00 : f32
      %30 = vector.broadcast %cst_24 : f32 to vector<8x1xf32>
      %c0_25 = arith.constant 0 : index
      %c0_26 = arith.constant 0 : index
      %c0_27 = arith.constant 0 : index
      %31 = vector.load %arg6[%c0_25, %c0_26, %c0_27] : memref<1x8x1xf32, #tpu.memory_space<vmem>>, vector<1x8x1xf32>
      %32 = vector.shape_cast %31 : vector<1x8x1xf32> to vector<8x1xf32>
      %33 = vector.shape_cast %30 : vector<8x1xf32> to vector<1x8x1xf32>
      tpu.vector_store %arg6[%c0_25, %c0_26, %c0_27], %33 {strides = array<i32>} : memref<1x8x1xf32, #tpu.memory_space<vmem>>, vector<1x8x1xf32>,
      %cst_28 = arith.constant 0.000000e+00 : f32
      %34 = vector.broadcast %cst_28 : f32 to vector<8x1xf32>
      %c0_29 = arith.constant 0 : index
      %c0_30 = arith.constant 0 : index
      %c0_31 = arith.constant 0 : index
      %35 = vector.load %arg7[%c0_29, %c0_30, %c0_31] : memref<1x8x1xf32, #tpu.memory_space<vmem>>, vector<1x8x1xf32>
      %36 = vector.shape_cast %35 : vector<1x8x1xf32> to vector<8x1xf32>
      %37 = vector.shape_cast %34 : vector<8x1xf32> to vector<1x8x1xf32>
      tpu.vector_store %arg7[%c0_29, %c0_30, %c0_31], %37 {strides = array<i32>} : memref<1x8x1xf32, #tpu.memory_space<vmem>>, vector<1x8x1xf32>,
    } else {
    }
    %c0_10 = arith.constant 0 : index
    %c0_11 = arith.constant 0 : index
    %c0_12 = arith.constant 0 : index
    %13 = vector.load %arg6[%c0_10, %c0_11, %c0_12] : memref<1x8x1xf32, #tpu.memory_space<vmem>>, vector<1x8x1xf32>
    %14 = vector.shape_cast %13 : vector<1x8x1xf32> to vector<8x1xf32>
    %cst_13 = arith.constant dense<0.000000e+00> : vector<8xf32>
    %15 = vector.multi_reduction <add>, %6, %cst_13 [1] : vector<8x512xf32> to vector<8xf32>
    %16 = vector.shape_cast %15 : vector<8xf32> to vector<8x1xf32>
    %17 = arith.addf %14, %16 : vector<8x1xf32>
    %c0_14 = arith.constant 0 : index
    %c0_15 = arith.constant 0 : index
    %c0_16 = arith.constant 0 : index
    %18 = vector.load %arg6[%c0_14, %c0_15, %c0_16] : memref<1x8x1xf32, #tpu.memory_space<vmem>>, vector<1x8x1xf32>
    %19 = vector.shape_cast %18 : vector<1x8x1xf32> to vector<8x1xf32>
    %20 = vector.shape_cast %17 : vector<8x1xf32> to vector<1x8x1xf32>
    tpu.vector_store %arg6[%c0_14, %c0_15, %c0_16], %20 {strides = array<i32>} : memref<1x8x1xf32, #tpu.memory_space<vmem>>, vector<1x8x1xf32>,
    %c0_17 = arith.constant 0 : index
    %c0_18 = arith.constant 0 : index
    %c0_19 = arith.constant 0 : index
    %21 = vector.load %arg7[%c0_17, %c0_18, %c0_19] : memref<1x8x1xf32, #tpu.memory_space<vmem>>, vector<1x8x1xf32>
    %22 = vector.shape_cast %21 : vector<1x8x1xf32> to vector<8x1xf32>
    %23 = arith.mulf %6, %6 : vector<8x512xf32>
    %cst_20 = arith.constant dense<0.000000e+00> : vector<8xf32>
    %24 = vector.multi_reduction <add>, %23, %cst_20 [1] : vector<8x512xf32> to vector<8xf32>
    %25 = vector.shape_cast %24 : vector<8xf32> to vector<8x1xf32>
    %26 = arith.addf %22, %25 : vector<8x1xf32>
    %c0_21 = arith.constant 0 : index
    %c0_22 = arith.constant 0 : index
    %c0_23 = arith.constant 0 : index
    %27 = vector.load %arg7[%c0_21, %c0_22, %c0_23] : memref<1x8x1xf32, #tpu.memory_space<vmem>>, vector<1x8x1xf32>
    %28 = vector.shape_cast %27 : vector<1x8x1xf32> to vector<8x1xf32>
    %29 = vector.shape_cast %26 : vector<8x1xf32> to vector<1x8x1xf32>
    tpu.vector_store %arg7[%c0_21, %c0_22, %c0_23], %29 {strides = array<i32>} : memref<1x8x1xf32, #tpu.memory_space<vmem>>, vector<1x8x1xf32>,
    return
  }
  func.func @transform_0(%arg0: i32, %arg1: i32) -> (i32, i32, i32) {
    %c0_i32 = arith.constant 0 : i32
    %c0_i32_0 = arith.constant 0 : i32
    return %arg0, %c0_i32, %arg1 : i32, i32, i32
  }
  func.func @transform_1(%arg0: i32, %arg1: i32) -> (i32, i32) {
    %c0_i32 = arith.constant 0 : i32
    %c0_i32_0 = arith.constant 0 : i32
    %c0_i32_1 = arith.constant 0 : i32
    return %c0_i32, %c0_i32_0 : i32, i32
  }
  func.func @transform_2(%arg0: i32, %arg1: i32) -> (i32, i32) {
    %c0_i32 = arith.constant 0 : i32
    %c0_i32_0 = arith.constant 0 : i32
    %c0_i32_1 = arith.constant 0 : i32
    return %c0_i32, %c0_i32_0 : i32, i32
  }
  func.func @transform_3(%arg0: i32, %arg1: i32) -> (i32, i32, i32) {
    %c0_i32 = arith.constant 0 : i32
    %c0_i32_0 = arith.constant 0 : i32
    return %arg0, %c0_i32, %arg1 : i32, i32, i32
  }
  func.func @transform_4(%arg0: i32, %arg1: i32) -> (i32, i32, i32) {
    %c0_i32 = arith.constant 0 : i32
    %c0_i32_0 = arith.constant 0 : i32
    %c0_i32_1 = arith.constant 0 : i32
    return %arg0, %c0_i32, %c0_i32_0 : i32, i32, i32
  }
  func.func @transform_5(%arg0: i32, %arg1: i32) -> (i32, i32, i32) {
    %c0_i32 = arith.constant 0 : i32
    %c0_i32_0 = arith.constant 0 : i32
    %c0_i32_1 = arith.constant 0 : i32
    return %arg0, %c0_i32, %c0_i32_0 : i32, i32, i32
  }
}

module attributes {stable_mosaic.version = 11 : i64} {
  func.func @_scale_shift_relu_kernel(%arg0: i32, %arg1: i32, %arg2: memref<1x8x512xf32, #tpu.memory_space<vmem>>, %arg3: memref<1x8x1xf32, #tpu.memory_space<vmem>>, %arg4: memref<1x8x1xf32, #tpu.memory_space<vmem>>, %arg5: memref<1x8x512xf32, #tpu.memory_space<vmem>>) attributes {dimension_semantics = [#tpu.dimension_semantics<parallel>, #tpu.dimension_semantics<parallel>], iteration_bounds = array<i64: 2, 1>, scalar_prefetch = 0 : i64, scratch_operands = 0 : i64, tpu.core_type = #tpu.core_type<tc>, window_params = [{transform_indices = @transform_0, window_bounds = array<i64: 1, 8, 512>}, {transform_indices = @transform_1, window_bounds = array<i64: 1, 8, 1>}, {transform_indices = @transform_2, window_bounds = array<i64: 1, 8, 1>}, {transform_indices = @transform_3, window_bounds = array<i64: 1, 8, 512>}]} {
    %c0 = arith.constant 0 : index
    %c0_0 = arith.constant 0 : index
    %c0_1 = arith.constant 0 : index
    %0 = vector.load %arg2[%c0, %c0_0, %c0_1] : memref<1x8x512xf32, #tpu.memory_space<vmem>>, vector<1x8x512xf32>
    %1 = vector.shape_cast %0 : vector<1x8x512xf32> to vector<8x512xf32>
    %c0_2 = arith.constant 0 : index
    %c0_3 = arith.constant 0 : index
    %c0_4 = arith.constant 0 : index
    %2 = vector.load %arg3[%c0_2, %c0_3, %c0_4] : memref<1x8x1xf32, #tpu.memory_space<vmem>>, vector<1x8x1xf32>
    %3 = vector.shape_cast %2 : vector<1x8x1xf32> to vector<8x1xf32>
    %4 = vector.broadcast %3 : vector<8x1xf32> to vector<8x512xf32>
    %5 = arith.mulf %1, %4 : vector<8x512xf32>
    %c0_5 = arith.constant 0 : index
    %c0_6 = arith.constant 0 : index
    %c0_7 = arith.constant 0 : index
    %6 = vector.load %arg4[%c0_5, %c0_6, %c0_7] : memref<1x8x1xf32, #tpu.memory_space<vmem>>, vector<1x8x1xf32>
    %7 = vector.shape_cast %6 : vector<1x8x1xf32> to vector<8x1xf32>
    %8 = vector.broadcast %7 : vector<8x1xf32> to vector<8x512xf32>
    %9 = arith.addf %5, %8 : vector<8x512xf32>
    %cst = arith.constant 0.000000e+00 : f32
    %10 = vector.broadcast %cst : f32 to vector<8x512xf32>
    %11 = arith.maximumf %9, %10 : vector<8x512xf32>
    %c0_8 = arith.constant 0 : index
    %c0_9 = arith.constant 0 : index
    %c0_10 = arith.constant 0 : index
    %12 = vector.load %arg5[%c0_8, %c0_9, %c0_10] : memref<1x8x512xf32, #tpu.memory_space<vmem>>, vector<1x8x512xf32>
    %13 = vector.shape_cast %12 : vector<1x8x512xf32> to vector<8x512xf32>
    %14 = vector.shape_cast %11 : vector<8x512xf32> to vector<1x8x512xf32>
    tpu.vector_store %arg5[%c0_8, %c0_9, %c0_10], %14 {strides = array<i32>} : memref<1x8x512xf32, #tpu.memory_space<vmem>>, vector<1x8x512xf32>,
    return
  }
  func.func @transform_0(%arg0: i32, %arg1: i32) -> (i32, i32, i32) {
    %c0_i32 = arith.constant 0 : i32
    %c0_i32_0 = arith.constant 0 : i32
    return %arg0, %c0_i32, %arg1 : i32, i32, i32
  }
  func.func @transform_1(%arg0: i32, %arg1: i32) -> (i32, i32, i32) {
    %c0_i32 = arith.constant 0 : i32
    %c0_i32_0 = arith.constant 0 : i32
    %c0_i32_1 = arith.constant 0 : i32
    return %arg0, %c0_i32, %c0_i32_0 : i32, i32, i32
  }
  func.func @transform_2(%arg0: i32, %arg1: i32) -> (i32, i32, i32) {
    %c0_i32 = arith.constant 0 : i32
    %c0_i32_0 = arith.constant 0 : i32
    %c0_i32_1 = arith.constant 0 : i32
    return %arg0, %c0_i32, %c0_i32_0 : i32, i32, i32
  }
  func.func @transform_3(%arg0: i32, %arg1: i32) -> (i32, i32, i32) {
    %c0_i32 = arith.constant 0 : i32
    %c0_i32_0 = arith.constant 0 : i32
    return %arg0, %c0_i32, %arg1 : i32, i32, i32
  }
}

</mosaic_0001>

<llo_original>
// kernel: squeeze.2
$region0: #{squeeze.2}
  %s0 = inlined_call_operand.vmem [shape: f32[2,8], index: 0, kind: input, shape index: {}]
  %s1 = inlined_call_operand.vmem [shape: f32[2,2,4], index: 1, kind: output, shape index: {}]
  $region1: #{squeeze.2} parent=0
    #allocation0 [shape = 'u8[8192]{0}', space=vmem, size = 0x2000, scoped, tag = 'scoped mem for output reshape']
    #allocation1 [shape = 'u8[4096]{0}', space=vmem, size = 0x1000, scoped, tag = 'scoped mem for input reshape']
    %s3 = sshllo.u32 0, 2
    %v4 = vld [vmem:[%s0] sm:%s3]
    %5 = vst [vmem:[#allocation1] sm:%s3] %v4
    %v6 = vld [vmem:[#allocation1] sm:$0x3]
    %vm7 = vcmask 31744
    %8 = vst.msk [vmem:[#allocation0] ss:$8 sm:$0x3] %vm7, %v6
    %v9 = vld [vmem:[#allocation1] sm:$0x3]
    %10 = vrot.lane.b32.xlu0 %v9, 124
    %v11 = vpop.permute.xlu0 %10
    %vm12 = vcmask 31744
    %s13 = scalar_lea.vmem [#allocation0], 1
    %14 = vst.msk [vmem:[%s13] ss:$8 sm:$0x3] %vm12, %v11
    %s16 = sshllo.u32 0, 2
    %v18 = vld [vmem:[#allocation0] sm:%s16]
    %s19 = sshllo.u32 0, 2
    %20 = vst [vmem:[%s1] sm:%s19] %v18
    %s21 = scalar_lea.vmem [#allocation0], 8
    %v22 = vld [vmem:[%s21] sm:%s16]
    %s23 = sshllo.u32 0, 2
    %s24 = scalar_lea.vmem %s1, 2
    %25 = vst [vmem:[%s24] sm:%s23] %v22

// kernel: decoder_conv.3
$region0: #{decoder_conv.3}
  #allocation0 [shape = 'u32[]', space=smem, size = 0x4, offset = 0x4, fixed_abs, tag = 'smem constant byte address 0x4 - core index']
  #allocation1 [shape = 'u32[144,128]{1,0:T(1,128)}', space=vmem, size = 0x12000, scoped, tag = 'internal scratch']
  %s0 = inlined_call_operand.vmem [shape: f32[2,8,512], index: 0, kind: input, shape index: {}]
  %s1 = inlined_call_operand.vmem [shape: f32[2,8,1], index: 1, kind: input, shape index: {}]
  %s2 = inlined_call_operand.vmem [shape: f32[2,8,1], index: 2, kind: input, shape index: {}]
  %s3 = inlined_call_operand.vmem [shape: f32[2,8,512], index: 3, kind: output, shape index: {}]
  %s4 = sld [smem:[#allocation0]]
  $region45: #{decoder_conv.3} parent=0
    _
  %s6 = ssub.s32 1, %s4
  %s7 = scalar_select 0, %s6, %s4
  loop: start=0, step=1, limit=4
  $region2: #{decoder_conv.3} parent=0 // loop_pre_header
    _
  $region3: #{decoder_conv.3} parent=0 // loop_header
    %s9 = sphi 0, %s13
    %p10 = scmp.ge.s32.totalorder %s9, 4
    %s16 = sphi 0, %s28
    %s17 = sphi 0, %s24
    %s18 = sphi 0, %s16
    %s19 = sphi 0, %s17
    %s20 = sphi 0, %s18
    %s21 = sphi 0, %s19
    %s33 = sphi 0, %s35
    %s36 = sphi 0, %s33
    %s37 = sphi 0, %s36
    %s53 = sphi 0, %s37
    %s59 = sphi 0, %s61
    %s62 = sphi 0, %s59
    %s63 = sphi 0, %s62
    %s79 = sphi 0, %s63
    %s85 = sphi 0, %s87
    %s88 = sphi 0, %s85
    %s89 = sphi 0, %s88
    %s105 = sphi 0, %s89
    %s113 = sphi 0, %s115
    %s116 = sphi 0, %s113
    %s117 = sphi 0, %s116
    %s133 = sphi 0, %s117
  $region4: #{decoder_conv.3} parent=0 // loop_header_branch
    %12 = sbr.rel (%p10) target = $region8
  $region5: #{decoder_conv.3} parent=0 // loop_body
    %s14 = ssub.s32 %s9, 1
    %s15 = ssub.s32 %s9, 2
    %s22 = sadd.s32 1, %s17
    %p23 = scmp.ge.s32.totalorder %s22, 1
    %s24 = scalar_select %p23, 0, %s22
    %s25 = sadd.s32 1, %s16
    %s26 = scalar_select %p23, %s25, %s16
    %p27 = scmp.ge.s32.totalorder %s26, 2
    %s28 = scalar_select %p27, 0, %s26
    %s29 = ssub.s32 %s16, %s28
    %s30 = ssub.s32 %s17, %s24
    %s31 = sor.u32 %s29, %s30
    %p32 = scmp.eq.s32.totalorder %s31, 0
    %s34 = sadd.s32 %s33, 1
    %s35 = scalar_select %p32, %s33, %s34
    %p38 = pneg %p32
    %p39 = scmp.eq.s32.totalorder %s9, 1
    %p40 = por %p38, %p39
    %p41 = scmp.ne.s32.totalorder %s33, %s36
    %p42 = scmp.eq.s32.totalorder %s9, 0
    %p43 = por %p41, %p42
    %p44 = scmp.ne.s32.totalorder %s33, %s36
    %p45 = scmp.eq.s32.totalorder %s14, 1
    %p46 = por %p44, %p45
    %p47 = scmp.ne.s32.totalorder %s36, %s37
    %p48 = scmp.eq.s32.totalorder %s14, 0
    %p49 = por %p47, %p48
    %p50 = scmp.ne.s32.totalorder %s36, %s37
    %p51 = scmp.eq.s32.totalorder %s15, 1
    %p52 = por %p50, %p51
    %p54 = scmp.ne.s32.totalorder %s37, %s53
    %p55 = scmp.eq.s32.totalorder %s15, 0
    %p56 = por %p54, %p55
    %s57 = ssub.s32 %s16, %s28
    %p58 = scmp.eq.s32.totalorder %s57, 0
    %s60 = sadd.s32 %s59, 1
    %s61 = scalar_select %p58, %s59, %s60
    %p64 = pneg %p58
    %p65 = scmp.eq.s32.totalorder %s9, 1
    %p66 = por %p64, %p65
    %p67 = scmp.ne.s32.totalorder %s59, %s62
    %p68 = scmp.eq.s32.totalorder %s9, 0
    %p69 = por %p67, %p68
    %p70 = scmp.ne.s32.totalorder %s59, %s62
    %p71 = scmp.eq.s32.totalorder %s14, 1
    %p72 = por %p70, %p71
    %p73 = scmp.ne.s32.totalorder %s62, %s63
    %p74 = scmp.eq.s32.totalorder %s14, 0
    %p75 = por %p73, %p74
    %p76 = scmp.ne.s32.totalorder %s62, %s63
    %p77 = scmp.eq.s32.totalorder %s15, 1
    %p78 = por %p76, %p77
    %p80 = scmp.ne.s32.totalorder %s63, %s79
    %p81 = scmp.eq.s32.totalorder %s15, 0
    %p82 = por %p80, %p81
    %s83 = ssub.s32 %s16, %s28
    %p84 = scmp.eq.s32.totalorder %s83, 0
    %s86 = sadd.s32 %s85, 1
    %s87 = scalar_select %p84, %s85, %s86
    %p90 = pneg %p84
    %p91 = scmp.eq.s32.totalorder %s9, 1
    %p92 = por %p90, %p91
    %p93 = scmp.ne.s32.totalorder %s85, %s88
    %p94 = scmp.eq.s32.totalorder %s9, 0
    %p95 = por %p93, %p94
    %p96 = scmp.ne.s32.totalorder %s85, %s88
    %p97 = scmp.eq.s32.totalorder %s14, 1
    %p98 = por %p96, %p97
    %p99 = scmp.ne.s32.totalorder %s88, %s89
    %p100 = scmp.eq.s32.totalorder %s14, 0
    %p101 = por %p99, %p100
    %p102 = scmp.ne.s32.totalorder %s88, %s89
    %p103 = scmp.eq.s32.totalorder %s15, 1
    %p104 = por %p102, %p103
    %p106 = scmp.ne.s32.totalorder %s89, %s105
    %p107 = scmp.eq.s32.totalorder %s15, 0
    %p108 = por %p106, %p107
    %s109 = ssub.s32 %s16, %s28
    %s110 = ssub.s32 %s17, %s24
    %s111 = sor.u32 %s109, %s110
    %p112 = scmp.eq.s32.totalorder %s111, 0
    %s114 = sadd.s32 %s113, 1
    %s115 = scalar_select %p112, %s113, %s114
    %p118 = pneg %p112
    %p119 = scmp.eq.s32.totalorder %s9, 1
    %p120 = por %p118, %p119
    %p121 = scmp.ne.s32.totalorder %s113, %s116
    %p122 = scmp.eq.s32.totalorder %s9, 0
    %p123 = por %p121, %p122
    %p124 = scmp.ne.s32.totalorder %s113, %s116
    %p125 = scmp.eq.s32.totalorder %s14, 1
    %p126 = por %p124, %p125
    %p127 = scmp.ne.s32.totalorder %s116, %s117
    %p128 = scmp.eq.s32.totalorder %s14, 0
    %p129 = por %p127, %p128
    %p130 = scmp.ne.s32.totalorder %s116, %s117
    %p131 = scmp.eq.s32.totalorder %s15, 1
    %p132 = por %p130, %p131
    %p134 = scmp.ne.s32.totalorder %s117, %s133
    %p135 = scmp.eq.s32.totalorder %s15, 0
    %p136 = por %p134, %p135
    %p137 = scmp.le.s32.totalorder 1, %s9
    %p138 = scmp.lt.s32.totalorder %s9, 3
    %p139 = pnand %p137, %p138
    %p140 = pneg %p139
    // Predicated region
    $region9: #{decoder_conv.3} parent=5 // pred_check
      _
    $region10: #{decoder_conv.3} parent=5 // pred_check_branch
      %142 = sbr.rel (%p139) target = $region12
    $region11: #{decoder_conv.3} parent=5 // pred_region
      %s143 = ssub.s32 %s9, 1
    $region12: #{decoder_conv.3} parent=5 // pred_fallthru
      _
    %p144 = scmp.lt.s32.totalorder %s9, 2
    // Predicated region
    $region13: #{decoder_conv.3} parent=5 // pred_check
      %p145 = pneg %p144
    $region14: #{decoder_conv.3} parent=5 // pred_check_branch
      %147 = sbr.rel (%p145) target = $region16
    $region15: #{decoder_conv.3} parent=5 // pred_region
      // Predicated region
      $region17: #{decoder_conv.3} parent=15 // pred_check
        %p148 = pneg %p43
      $region18: #{decoder_conv.3} parent=15 // pred_check_branch
        %150 = sbr.rel (%p148) target = $region20
      $region19: #{decoder_conv.3} parent=15 // pred_region
        %s151 = smul.u32 4, %s17
        %p152 = scmp.lt.s32.totalorder %s16, 1
        %s153 = scalar_select %p152, %s16, 1
        %p154 = scmp.lt.s32.totalorder %s151, 3
        %s155 = scalar_select %p154, %s151, 3
        %s156 = smul.addr %s153, 4
        %s157 = sadd.s32 %s155, %s156
        %s158 = smul.addr %s157, 8
        %s159 = scalar_lea.vmem %s0, %s158
        %s160 = smul.u32 4, %s17
      $region20: #{decoder_conv.3} parent=15 // pred_fallthru
        _
      // Predicated region
      $region21: #{decoder_conv.3} parent=15 // pred_check
        %p161 = pneg %p69
      $region22: #{decoder_conv.3} parent=15 // pred_check_branch
        %163 = sbr.rel (%p161) target = $region24
      $region23: #{decoder_conv.3} parent=15 // pred_region
        %p164 = scmp.lt.s32.totalorder %s16, 1
        %s165 = scalar_select %p164, %s16, 1
        %s166 = smul.addr %s165, 8
        %s167 = scalar_lea.vmem %s1, %s166
      $region24: #{decoder_conv.3} parent=15 // pred_fallthru
        _
      // Predicated region
      $region25: #{decoder_conv.3} parent=15 // pred_check
        %p168 = pneg %p95
      $region26: #{decoder_conv.3} parent=15 // pred_check_branch
        %170 = sbr.rel (%p168) target = $region28
      $region27: #{decoder_conv.3} parent=15 // pred_region
        %p171 = scmp.lt.s32.totalorder %s16, 1
        %s172 = scalar_select %p171, %s16, 1
        %s173 = smul.addr %s172, 8
        %s174 = scalar_lea.vmem %s2, %s173
      $region28: #{decoder_conv.3} parent=15 // pred_fallthru
        _
    $region16: #{decoder_conv.3} parent=5 // pred_fallthru
      _
    %p175 = scmp.le.s32.totalorder 1, %s9
    %p176 = scmp.lt.s32.totalorder %s9, 3
    %p177 = pnand %p175, %p176
    %p178 = pneg %p177
    // Predicated region
    $region29: #{decoder_conv.3} parent=5 // pred_check
      _
    $region30: #{decoder_conv.3} parent=5 // pred_check_branch
      %180 = sbr.rel (%p177) target = $region32
    $region31: #{decoder_conv.3} parent=5 // pred_region
      %s181 = ssub.s32 %s9, 1
      %s182 = smul.u32 4, %s19
      %p183 = scmp.lt.s32.totalorder %s18, 1
      %s184 = scalar_select %p183, %s18, 1
      %p185 = scmp.lt.s32.totalorder %s182, 3
      %s186 = scalar_select %p185, %s182, 3
      %s187 = smul.addr %s184, 4
      %s188 = sadd.s32 %s186, %s187
      %s189 = smul.addr %s188, 8
      %s190 = scalar_lea.vmem %s0, %s189
      %p191 = pneg %p49
      %p192 = pneg %p46
      %p193 = scmp.lt.s32.totalorder %s18, 1
      %s194 = scalar_select %p193, %s18, 1
      %s195 = smul.addr %s194, 8
      %s196 = scalar_lea.vmem %s1, %s195
      %p197 = pneg %p75
      %p198 = pneg %p72
      %p199 = scmp.lt.s32.totalorder %s18, 1
      %s200 = scalar_select %p199, %s18, 1
      %s201 = smul.addr %s200, 8
      %s202 = scalar_lea.vmem %s2, %s201
      %p203 = pneg %p101
      %p204 = pneg %p98
      %p205 = pneg %p129
      %p206 = pneg %p126
      %s207 = smul.u32 4, %s19
      %p208 = scmp.lt.s32.totalorder %s18, 1
      %s209 = scalar_select %p208, %s18, 1
      %p210 = scmp.lt.s32.totalorder %s207, 3
      %s211 = scalar_select %p210, %s207, 3
      %s212 = smul.addr %s209, 4
      %s213 = sadd.s32 %s211, %s212
      %s214 = smul.addr %s213, 8
      %s215 = scalar_lea.vmem %s3, %s214
      %s216 = smul.u32 4, %s19
      %p217 = scmp.lt.s32.totalorder %s18, 1
      %s218 = scalar_select %p217, %s18, 1
      %p219 = scmp.lt.s32.totalorder %s216, 3
      %s220 = scalar_select %p219, %s216, 3
      %s221 = smul.addr %s218, 4
      %s222 = sadd.s32 %s220, %s221
      %s223 = smul.addr %s222, 8
      %s224 = scalar_lea.vmem %s0, %s223
      %s225 = smul.u32 4, %s19
      %p226 = scmp.lt.s32.totalorder %s18, 1
      %s227 = scalar_select %p226, %s18, 1
      %s228 = smul.addr %s227, 8
      %s229 = scalar_lea.vmem %s1, %s228
      %p230 = scmp.lt.s32.totalorder %s18, 1
      %s231 = scalar_select %p230, %s18, 1
      %s232 = smul.addr %s231, 8
      %s233 = scalar_lea.vmem %s2, %s232
      %s234 = smul.u32 4, %s19
      %p235 = scmp.lt.s32.totalorder %s18, 1
      %s236 = scalar_select %p235, %s18, 1
      %p237 = scmp.lt.s32.totalorder %s234, 3
      %s238 = scalar_select %p237, %s234, 3
      %s239 = smul.addr %s236, 4
      %s240 = sadd.s32 %s238, %s239
      %s241 = smul.addr %s240, 8
      %s242 = scalar_lea.vmem %s3, %s241
      %s243 = smul.u32 4, %s19
      %v244 = vld [vmem:[%s224] sm:$0xff]
      %v245 = vld [vmem:[%s224 + $0x8] sm:$0xff]
      %v246 = vld [vmem:[%s224 + $0x10] sm:$0xff]
      %v247 = vld [vmem:[%s224 + $0x18] sm:$0xff]
      %v248 = vld [vmem:[%s229] sm:$0xff]
      %250 = vset.pattern.permute.xlu0 0
      %251 = vperm.xlu0 %250, %v248
      %v252 = vpop.permute.xlu0 %251
      %v254 = vmul.f32 %v244, %v252
      %v255 = vmul.f32 %v245, %v252
      %v256 = vmul.f32 %v246, %v252
      %v257 = vmul.f32 %v247, %v252
      %v258 = vld [vmem:[%s233] sm:$0xff]
      %260 = vset.pattern.permute.xlu0 0
      %261 = vperm.xlu0 %260, %v258
      %v262 = vpop.permute.xlu0 %261
      %v264 = vadd.f32 %v254, %v262
      %v265 = vadd.f32 %v255, %v262
      %v266 = vadd.f32 %v256, %v262
      %v267 = vadd.f32 %v257, %v262
      %v268 = vmax.f32 %v264, 0.0
      %v269 = vmax.f32 %v265, 0.0
      %v270 = vmax.f32 %v266, 0.0
      %v271 = vmax.f32 %v267, 0.0
      %272 = vst [vmem:[%s242] sm:$0xff] %v268
      %273 = vst [vmem:[%s242 + $0x8] sm:$0xff] %v269
      %274 = vst [vmem:[%s242 + $0x10] sm:$0xff] %v270
      %275 = vst [vmem:[%s242 + $0x18] sm:$0xff] %v271
      %s276 = smul.u32 4, %s19
      %p277 = scmp.lt.s32.totalorder %s18, 1
      %s278 = scalar_select %p277, %s18, 1
      %p279 = scmp.lt.s32.totalorder %s276, 3
      %s280 = scalar_select %p279, %s276, 3
      %s281 = smul.addr %s278, 4
      %s282 = sadd.s32 %s280, %s281
      %s283 = smul.addr %s282, 8
      %s284 = scalar_lea.vmem %s3, %s283
      // Predicated region
      $region33: #{decoder_conv.3} parent=31 // pred_check
        %p285 = pneg %p126
      $region34: #{decoder_conv.3} parent=31 // pred_check_branch
        %287 = sbr.rel (%p285) target = $region36
      $region35: #{decoder_conv.3} parent=31 // pred_region
        %s288 = smul.u32 4, %s19
      $region36: #{decoder_conv.3} parent=31 // pred_fallthru
        _
    $region32: #{decoder_conv.3} parent=5 // pred_fallthru
      _
    %p289 = scmp.le.s32.totalorder 2, %s9
    // Predicated region
    $region37: #{decoder_conv.3} parent=5 // pred_check
      %p290 = pneg %p289
    $region38: #{decoder_conv.3} parent=5 // pred_check_branch
      %292 = sbr.rel (%p290) target = $region40
    $region39: #{decoder_conv.3} parent=5 // pred_region
      %s293 = ssub.s32 %s9, 2
      // Predicated region
      $region41: #{decoder_conv.3} parent=39 // pred_check
        %p294 = pneg %p132
      $region42: #{decoder_conv.3} parent=39 // pred_check_branch
        %296 = sbr.rel (%p294) target = $region44
      $region43: #{decoder_conv.3} parent=39 // pred_region
        %s297 = smul.u32 4, %s21
        %p298 = scmp.lt.s32.totalorder %s20, 1
        %s299 = scalar_select %p298, %s20, 1
        %p300 = scmp.lt.s32.totalorder %s297, 3
        %s301 = scalar_select %p300, %s297, 3
        %s302 = smul.addr %s299, 4
        %s303 = sadd.s32 %s301, %s302
        %s304 = smul.addr %s303, 8
        %s305 = scalar_lea.vmem %s3, %s304
      $region44: #{decoder_conv.3} parent=39 // pred_fallthru
        _
    $region40: #{decoder_conv.3} parent=5 // pred_fallthru
      _
  $region6: #{decoder_conv.3} parent=0 // loop_footer
    %s13 = sadd.s32 1, %s9
  $region7: #{decoder_conv.3} parent=0 // loop_footer_branch
    %8 = sbr.rel target = $region3
  $region8: #{decoder_conv.3} parent=0 // loop_exit
    _

// kernel: decoder_conv.2
$region0: #{decoder_conv.2}
  #allocation0 [shape = 'u32[]', space=smem, size = 0x4, offset = 0x4, fixed_abs, tag = 'smem constant byte address 0x4 - core index']
  #allocation1 [shape = 'u32[144,128]{1,0:T(1,128)}', space=vmem, size = 0x12000, scoped, tag = 'internal scratch']
  %s0 = inlined_call_operand.vmem [shape: f32[2,128,512], index: 0, kind: input, shape index: {}]
  %s1 = inlined_call_operand.vmem [shape: f32[8,128], index: 1, kind: input, shape index: {}]
  %s2 = inlined_call_operand.vmem [shape: f32[8,1], index: 2, kind: input, shape index: {}]
  %s3 = inlined_call_operand.vmem [shape: f32[2,8,512], index: 3, kind: output, shape index: {0}]
  %s4 = inlined_call_operand.vmem [shape: f32[2,8,1], index: 4, kind: output, shape index: {1}]
  %s5 = inlined_call_operand.vmem [shape: f32[2,8,1], index: 5, kind: output, shape index: {2}]
  %6 = xla_tuple %s3, %s4, %s5
  %s7 = sld [smem:[#allocation0]]
  $region65: #{decoder_conv.2} parent=0
    _
  %s9 = ssub.s32 1, %s7
  %s10 = scalar_select 0, %s9, %s7
  loop: start=0, step=1, limit=4
  $region2: #{decoder_conv.2} parent=0 // loop_pre_header
    _
  $region3: #{decoder_conv.2} parent=0 // loop_header
    %s12 = sphi 0, %s16
    %p13 = scmp.ge.s32.totalorder %s12, 4
    %s19 = sphi 0, %s31
    %s20 = sphi 0, %s27
    %s21 = sphi 0, %s19
    %s22 = sphi 0, %s20
    %s23 = sphi 0, %s21
    %s24 = sphi 0, %s22
    %s36 = sphi 0, %s38
    %s39 = sphi 0, %s36
    %s40 = sphi 0, %s39
    %s56 = sphi 0, %s40
    %s60 = sphi 0, %s60
    %s62 = sphi 0, %s60
    %s63 = sphi 0, %s62
    %s77 = sphi 0, %s63
    %s81 = sphi 0, %s81
    %s83 = sphi 0, %s81
    %s84 = sphi 0, %s83
    %s98 = sphi 0, %s84
    %s106 = sphi 0, %s108
    %s109 = sphi 0, %s106
    %s110 = sphi 0, %s109
    %s126 = sphi 0, %s110
    %s132 = sphi 0, %s134
    %s135 = sphi 0, %s132
    %s136 = sphi 0, %s135
    %s152 = sphi 0, %s136
    %s158 = sphi 0, %s160
    %s161 = sphi 0, %s158
    %s162 = sphi 0, %s161
    %s178 = sphi 0, %s162
  $region4: #{decoder_conv.2} parent=0 // loop_header_branch
    %15 = sbr.rel (%p13) target = $region8
  $region5: #{decoder_conv.2} parent=0 // loop_body
    %s17 = ssub.s32 %s12, 1
    %s18 = ssub.s32 %s12, 2
    %s25 = sadd.s32 1, %s20
    %p26 = scmp.ge.s32.totalorder %s25, 1
    %s27 = scalar_select %p26, 0, %s25
    %s28 = sadd.s32 1, %s19
    %s29 = scalar_select %p26, %s28, %s19
    %p30 = scmp.ge.s32.totalorder %s29, 2
    %s31 = scalar_select %p30, 0, %s29
    %s32 = ssub.s32 %s19, %s31
    %s33 = ssub.s32 %s20, %s27
    %s34 = sor.u32 %s32, %s33
    %p35 = scmp.eq.s32.totalorder %s34, 0
    %s37 = sadd.s32 %s36, 1
    %s38 = scalar_select %p35, %s36, %s37
    %p41 = pneg %p35
    %p42 = scmp.eq.s32.totalorder %s12, 1
    %p43 = por %p41, %p42
    %p44 = scmp.ne.s32.totalorder %s36, %s39
    %p45 = scmp.eq.s32.totalorder %s12, 0
    %p46 = por %p44, %p45
    %p47 = scmp.ne.s32.totalorder %s36, %s39
    %p48 = scmp.eq.s32.totalorder %s17, 1
    %p49 = por %p47, %p48
    %p50 = scmp.ne.s32.totalorder %s39, %s40
    %p51 = scmp.eq.s32.totalorder %s17, 0
    %p52 = por %p50, %p51
    %p53 = scmp.ne.s32.totalorder %s39, %s40
    %p54 = scmp.eq.s32.totalorder %s18, 1
    %p55 = por %p53, %p54
    %p57 = scmp.ne.s32.totalorder %s40, %s56
    %p58 = scmp.eq.s32.totalorder %s18, 0
    %p59 = por %p57, %p58
    %s61 = sadd.s32 %s60, 1
    %p64 = scmp.eq.s32.totalorder %s12, 1
    %p65 = scmp.ne.s32.totalorder %s60, %s62
    %p66 = scmp.eq.s32.totalorder %s12, 0
    %p67 = por %p65, %p66
    %p68 = scmp.ne.s32.totalorder %s60, %s62
    %p69 = scmp.eq.s32.totalorder %s17, 1
    %p70 = por %p68, %p69
    %p71 = scmp.ne.s32.totalorder %s62, %s63
    %p72 = scmp.eq.s32.totalorder %s17, 0
    %p73 = por %p71, %p72
    %p74 = scmp.ne.s32.totalorder %s62, %s63
    %p75 = scmp.eq.s32.totalorder %s18, 1
    %p76 = por %p74, %p75
    %p78 = scmp.ne.s32.totalorder %s63, %s77
    %p79 = scmp.eq.s32.totalorder %s18, 0
    %p80 = por %p78, %p79
    %s82 = sadd.s32 %s81, 1
    %p85 = scmp.eq.s32.totalorder %s12, 1
    %p86 = scmp.ne.s32.totalorder %s81, %s83
    %p87 = scmp.eq.s32.totalorder %s12, 0
    %p88 = por %p86, %p87
    %p89 = scmp.ne.s32.totalorder %s81, %s83
    %p90 = scmp.eq.s32.totalorder %s17, 1
    %p91 = por %p89, %p90
    %p92 = scmp.ne.s32.totalorder %s83, %s84
    %p93 = scmp.eq.s32.totalorder %s17, 0
    %p94 = por %p92, %p93
    %p95 = scmp.ne.s32.totalorder %s83, %s84
    %p96 = scmp.eq.s32.totalorder %s18, 1
    %p97 = por %p95, %p96
    %p99 = scmp.ne.s32.totalorder %s84, %s98
    %p100 = scmp.eq.s32.totalorder %s18, 0
    %p101 = por %p99, %p100
    %s102 = ssub.s32 %s19, %s31
    %s103 = ssub.s32 %s20, %s27
    %s104 = sor.u32 %s102, %s103
    %p105 = scmp.eq.s32.totalorder %s104, 0
    %s107 = sadd.s32 %s106, 1
    %s108 = scalar_select %p105, %s106, %s107
    %p111 = pneg %p105
    %p112 = scmp.eq.s32.totalorder %s12, 1
    %p113 = por %p111, %p112
    %p114 = scmp.ne.s32.totalorder %s106, %s109
    %p115 = scmp.eq.s32.totalorder %s12, 0
    %p116 = por %p114, %p115
    %p117 = scmp.ne.s32.totalorder %s106, %s109
    %p118 = scmp.eq.s32.totalorder %s17, 1
    %p119 = por %p117, %p118
    %p120 = scmp.ne.s32.totalorder %s109, %s110
    %p121 = scmp.eq.s32.totalorder %s17, 0
    %p122 = por %p120, %p121
    %p123 = scmp.ne.s32.totalorder %s109, %s110
    %p124 = scmp.eq.s32.totalorder %s18, 1
    %p125 = por %p123, %p124
    %p127 = scmp.ne.s32.totalorder %s110, %s126
    %p128 = scmp.eq.s32.totalorder %s18, 0
    %p129 = por %p127, %p128
    %s130 = ssub.s32 %s19, %s31
    %p131 = scmp.eq.s32.totalorder %s130, 0
    %s133 = sadd.s32 %s132, 1
    %s134 = scalar_select %p131, %s132, %s133
    %p137 = pneg %p131
    %p138 = scmp.eq.s32.totalorder %s12, 1
    %p139 = por %p137, %p138
    %p140 = scmp.ne.s32.totalorder %s132, %s135
    %p141 = scmp.eq.s32.totalorder %s12, 0
    %p142 = por %p140, %p141
    %p143 = scmp.ne.s32.totalorder %s132, %s135
    %p144 = scmp.eq.s32.totalorder %s17, 1
    %p145 = por %p143, %p144
    %p146 = scmp.ne.s32.totalorder %s135, %s136
    %p147 = scmp.eq.s32.totalorder %s17, 0
    %p148 = por %p146, %p147
    %p149 = scmp.ne.s32.totalorder %s135, %s136
    %p150 = scmp.eq.s32.totalorder %s18, 1
    %p151 = por %p149, %p150
    %p153 = scmp.ne.s32.totalorder %s136, %s152
    %p154 = scmp.eq.s32.totalorder %s18, 0
    %p155 = por %p153, %p154
    %s156 = ssub.s32 %s19, %s31
    %p157 = scmp.eq.s32.totalorder %s156, 0
    %s159 = sadd.s32 %s158, 1
    %s160 = scalar_select %p157, %s158, %s159
    %p163 = pneg %p157
    %p164 = scmp.eq.s32.totalorder %s12, 1
    %p165 = por %p163, %p164
    %p166 = scmp.ne.s32.totalorder %s158, %s161
    %p167 = scmp.eq.s32.totalorder %s12, 0
    %p168 = por %p166, %p167
    %p169 = scmp.ne.s32.totalorder %s158, %s161
    %p170 = scmp.eq.s32.totalorder %s17, 1
    %p171 = por %p169, %p170
    %p172 = scmp.ne.s32.totalorder %s161, %s162
    %p173 = scmp.eq.s32.totalorder %s17, 0
    %p174 = por %p172, %p173
    %p175 = scmp.ne.s32.totalorder %s161, %s162
    %p176 = scmp.eq.s32.totalorder %s18, 1
    %p177 = por %p175, %p176
    %p179 = scmp.ne.s32.totalorder %s162, %s178
    %p180 = scmp.eq.s32.totalorder %s18, 0
    %p181 = por %p179, %p180
    %p182 = scmp.le.s32.totalorder 1, %s12
    %p183 = scmp.lt.s32.totalorder %s12, 3
    %p184 = pnand %p182, %p183
    %p185 = pneg %p184
    // Predicated region
    $region9: #{decoder_conv.2} parent=5 // pred_check
      _
    $region10: #{decoder_conv.2} parent=5 // pred_check_branch
      %187 = sbr.rel (%p184) target = $region12
    $region11: #{decoder_conv.2} parent=5 // pred_region
      %s188 = ssub.s32 %s12, 1
      // Predicated region
      $region13: #{decoder_conv.2} parent=11 // pred_check
        %p189 = pneg %p73
      $region14: #{decoder_conv.2} parent=11 // pred_check_branch
        %191 = sbr.rel (%p189) target = $region16
      $region15: #{decoder_conv.2} parent=11 // pred_region
        _
      $region16: #{decoder_conv.2} parent=11 // pred_fallthru
        _
      // Predicated region
      $region17: #{decoder_conv.2} parent=11 // pred_check
        %p192 = pneg %p94
      $region18: #{decoder_conv.2} parent=11 // pred_check_branch
        %194 = sbr.rel (%p192) target = $region20
      $region19: #{decoder_conv.2} parent=11 // pred_region
        _
      $region20: #{decoder_conv.2} parent=11 // pred_fallthru
        _
    $region12: #{decoder_conv.2} parent=5 // pred_fallthru
      _
    %p195 = scmp.lt.s32.totalorder %s12, 2
    // Predicated region
    $region21: #{decoder_conv.2} parent=5 // pred_check
      %p196 = pneg %p195
    $region22: #{decoder_conv.2} parent=5 // pred_check_branch
      %198 = sbr.rel (%p196) target = $region24
    $region23: #{decoder_conv.2} parent=5 // pred_region
      // Predicated region
      $region25: #{decoder_conv.2} parent=23 // pred_check
        %p199 = pneg %p46
      $region26: #{decoder_conv.2} parent=23 // pred_check_branch
        %201 = sbr.rel (%p199) target = $region28
      $region27: #{decoder_conv.2} parent=23 // pred_region
        %s202 = smul.u32 4, %s20
        %p203 = scmp.lt.s32.totalorder %s19, 1
        %s204 = scalar_select %p203, %s19, 1
        %p205 = scmp.lt.s32.totalorder %s202, 3
        %s206 = scalar_select %p205, %s202, 3
        %s207 = smul.addr %s204, 64
        %s208 = sadd.s32 %s206, %s207
        %s209 = smul.addr %s208, 8
        %s210 = scalar_lea.vmem %s0, %s209
        %s211 = smul.u32 4, %s20
      $region28: #{decoder_conv.2} parent=23 // pred_fallthru
        _
    $region24: #{decoder_conv.2} parent=5 // pred_fallthru
      _
    %p212 = scmp.le.s32.totalorder 1, %s12
    %p213 = scmp.lt.s32.totalorder %s12, 3
    %p214 = pnand %p212, %p213
    %p215 = pneg %p214
    // Predicated region
    $region29: #{decoder_conv.2} parent=5 // pred_check
      _
    $region30: #{decoder_conv.2} parent=5 // pred_check_branch
      %217 = sbr.rel (%p214) target = $region32
    $region31: #{decoder_conv.2} parent=5 // pred_region
      %s218 = ssub.s32 %s12, 1
      %s219 = smul.u32 4, %s22
      %p220 = scmp.lt.s32.totalorder %s21, 1
      %s221 = scalar_select %p220, %s21, 1
      %p222 = scmp.lt.s32.totalorder %s219, 3
      %s223 = scalar_select %p222, %s219, 3
      %s224 = smul.addr %s221, 64
      %s225 = sadd.s32 %s223, %s224
      %s226 = smul.addr %s225, 8
      %s227 = scalar_lea.vmem %s0, %s226
      %p228 = pneg %p52
      %p229 = pneg %p49
      %p230 = pneg %p73
      %p231 = pneg %p70
      %p232 = pneg %p94
      %p233 = pneg %p91
      %p234 = pneg %p122
      %p235 = pneg %p119
      %s236 = smul.u32 4, %s22
      %p237 = scmp.lt.s32.totalorder %s21, 1
      %s238 = scalar_select %p237, %s21, 1
      %p239 = scmp.lt.s32.totalorder %s236, 3
      %s240 = scalar_select %p239, %s236, 3
      %s241 = smul.addr %s238, 4
      %s242 = sadd.s32 %s240, %s241
      %s243 = smul.addr %s242, 8
      %s244 = scalar_lea.vmem %s3, %s243
      %p245 = pneg %p148
      %p246 = pneg %p145
      %p247 = scmp.lt.s32.totalorder %s21, 1
      %s248 = scalar_select %p247, %s21, 1
      %s249 = smul.addr %s248, 8
      %s250 = scalar_lea.vmem %s4, %s249
      %p251 = pneg %p174
      %p252 = pneg %p171
      %p253 = scmp.lt.s32.totalorder %s21, 1
      %s254 = scalar_select %p253, %s21, 1
      %s255 = smul.addr %s254, 8
      %s256 = scalar_lea.vmem %s5, %s255
      %s257 = smul.u32 4, %s22
      %p258 = scmp.lt.s32.totalorder %s21, 1
      %s259 = scalar_select %p258, %s21, 1
      %p260 = scmp.lt.s32.totalorder %s257, 3
      %s261 = scalar_select %p260, %s257, 3
      %s262 = smul.addr %s259, 64
      %s263 = sadd.s32 %s261, %s262
      %s264 = smul.addr %s263, 8
      %s265 = scalar_lea.vmem %s0, %s264
      %s266 = smul.u32 4, %s22
      %s267 = smul.u32 4, %s22
      %p268 = scmp.lt.s32.totalorder %s21, 1
      %s269 = scalar_select %p268, %s21, 1
      %p270 = scmp.lt.s32.totalorder %s267, 3
      %s271 = scalar_select %p270, %s267, 3
      %s272 = smul.addr %s269, 4
      %s273 = sadd.s32 %s271, %s272
      %s274 = smul.addr %s273, 8
      %s275 = scalar_lea.vmem %s3, %s274
      %s276 = smul.u32 4, %s22
      %p277 = scmp.lt.s32.totalorder %s21, 1
      %s278 = scalar_select %p277, %s21, 1
      %s279 = smul.addr %s278, 8
      %s280 = scalar_lea.vmem %s4, %s279
      %p281 = scmp.lt.s32.totalorder %s21, 1
      %s282 = scalar_select %p281, %s21, 1
      %s283 = smul.addr %s282, 8
      %s284 = scalar_lea.vmem %s5, %s283
      %v285 = vld [vmem:[%s1] sm:$0xff]
      %v286 = vld [vmem:[%s265] sm:$0xff]
      %v287 = vld [vmem:[%s265 + $0x8] sm:$0xff]
      %v288 = vld [vmem:[%s265 + $0x10] sm:$0xff]
      %v289 = vld [vmem:[%s265 + $0x18] sm:$0xff]
      %v290 = vld [vmem:[%s265 + $0x20] sm:$0xff]
      %v291 = vld [vmem:[%s265 + $0x28] sm:$0xff]
      %v292 = vld [vmem:[%s265 + $0x30] sm:$0xff]
      %v293 = vld [vmem:[%s265 + $0x38] sm:$0xff]
      %v294 = vld [vmem:[%s265 + $0x40] sm:$0xff]
      %v295 = vld [vmem:[%s265 + $0x48] sm:$0xff]
      %v296 = vld [vmem:[%s265 + $0x50] sm:$0xff]
      %v297 = vld [vmem:[%s265 + $0x58] sm:$0xff]
      %v298 = vld [vmem:[%s265 + $0x60] sm:$0xff]
      %v299 = vld [vmem:[%s265 + $0x68] sm:$0xff]
      %v300 = vld [vmem:[%s265 + $0x70] sm:$0xff]
      %v301 = vld [vmem:[%s265 + $0x78] sm:$0xff]
      %v302 = vld [vmem:[%s265 + $0x80] sm:$0xff]
      %v303 = vld [vmem:[%s265 + $0x88] sm:$0xff]
      %v304 = vld [vmem:[%s265 + $0x90] sm:$0xff]
      %v305 = vld [vmem:[%s265 + $0x98] sm:$0xff]
      %v306 = vld [vmem:[%s265 + $0xa0] sm:$0xff]
      %v307 = vld [vmem:[%s265 + $0xa8] sm:$0xff]
      %v308 = vld [vmem:[%s265 + $0xb0] sm:$0xff]
      %v309 = vld [vmem:[%s265 + $0xb8] sm:$0xff]
      %v310 = vld [vmem:[%s265 + $0xc0] sm:$0xff]
      %v311 = vld [vmem:[%s265 + $0xc8] sm:$0xff]
      %v312 = vld [vmem:[%s265 + $0xd0] sm:$0xff]
      %v313 = vld [vmem:[%s265 + $0xd8] sm:$0xff]
      %v314 = vld [vmem:[%s265 + $0xe0] sm:$0xff]
      %v315 = vld [vmem:[%s265 + $0xe8] sm:$0xff]
      %v316 = vld [vmem:[%s265 + $0xf0] sm:$0xff]
      %v317 = vld [vmem:[%s265 + $0xf8] sm:$0xff]
      %v318 = vld [vmem:[%s265 + $0x100] sm:$0xff]
      %v319 = vld [vmem:[%s265 + $0x108] sm:$0xff]
      %v320 = vld [vmem:[%s265 + $0x110] sm:$0xff]
      %v321 = vld [vmem:[%s265 + $0x118] sm:$0xff]
      %v322 = vld [vmem:[%s265 + $0x120] sm:$0xff]
      %v323 = vld [vmem:[%s265 + $0x128] sm:$0xff]
      %v324 = vld [vmem:[%s265 + $0x130] sm:$0xff]
      %v325 = vld [vmem:[%s265 + $0x138] sm:$0xff]
      %v326 = vld [vmem:[%s265 + $0x140] sm:$0xff]
      %v327 = vld [vmem:[%s265 + $0x148] sm:$0xff]
      %v328 = vld [vmem:[%s265 + $0x150] sm:$0xff]
      %v329 = vld [vmem:[%s265 + $0x158] sm:$0xff]
      %v330 = vld [vmem:[%s265 + $0x160] sm:$0xff]
      %v331 = vld [vmem:[%s265 + $0x168] sm:$0xff]
      %v332 = vld [vmem:[%s265 + $0x170] sm:$0xff]
      %v333 = vld [vmem:[%s265 + $0x178] sm:$0xff]
      %v334 = vld [vmem:[%s265 + $0x180] sm:$0xff]
      %v335 = vld [vmem:[%s265 + $0x188] sm:$0xff]
      %v336 = vld [vmem:[%s265 + $0x190] sm:$0xff]
      %v337 = vld [vmem:[%s265 + $0x198] sm:$0xff]
      %v338 = vld [vmem:[%s265 + $0x1a0] sm:$0xff]
      %v339 = vld [vmem:[%s265 + $0x1a8] sm:$0xff]
      %v340 = vld [vmem:[%s265 + $0x1b0] sm:$0xff]
      %v341 = vld [vmem:[%s265 + $0x1b8] sm:$0xff]
      %v342 = vld [vmem:[%s265 + $0x1c0] sm:$0xff]
      %v343 = vld [vmem:[%s265 + $0x1c8] sm:$0xff]
      %v344 = vld [vmem:[%s265 + $0x1d0] sm:$0xff]
      %v345 = vld [vmem:[%s265 + $0x1d8] sm:$0xff]
      %v346 = vld [vmem:[%s265 + $0x1e0] sm:$0xff]
      %v347 = vld [vmem:[%s265 + $0x1e8] sm:$0xff]
      %v348 = vld [vmem:[%s265 + $0x1f0] sm:$0xff]
      %v349 = vld [vmem:[%s265 + $0x1f8] sm:$0xff]
      %v350 = vld [vmem:[%s2] sm:$0xff]
      %352 = vset.pattern.permute.xlu0 0
      %353 = vperm.xlu0 %352, %v350
      %v354 = vpop.permute.xlu0 %353
      %356 = vmatprep.subr.mxu0 %v287
      %357 = vmatpush1.msra.mxu0 %v286
      %358 = vmatprep.subr.mxu0 %v291
      %359 = vmatpush1.msra.mxu0 %v290
      %360 = vmatprep.subr.mxu0 %v295
      %361 = vmatpush1.msra.mxu0 %v294
      %362 = vmatprep.subr.mxu0 %v299
      %363 = vmatpush1.msra.mxu0 %v298
      %364 = vmatprep.subr.mxu0 %v303
      %365 = vmatpush1.msra.mxu0 %v302
      %366 = vmatprep.subr.mxu0 %v307
      %367 = vmatpush1.msra.mxu0 %v306
      %368 = vmatprep.subr.mxu0 %v311
      %369 = vmatpush1.msra.mxu0 %v310
      %370 = vmatprep.subr.mxu0 %v315
      %371 = vmatpush1.msra.mxu0 %v314
      %372 = vmatprep.subr.mxu0 %v319
      %373 = vmatpush1.msra.mxu0 %v318
      %374 = vmatprep.subr.mxu0 %v323
      %375 = vmatpush1.msra.mxu0 %v322
      %376 = vmatprep.subr.mxu0 %v327
      %377 = vmatpush1.msra.mxu0 %v326
      %378 = vmatprep.subr.mxu0 %v331
      %379 = vmatpush1.msra.mxu0 %v330
      %380 = vmatprep.subr.mxu0 %v335
      %381 = vmatpush1.msra.mxu0 %v334
      %382 = vmatprep.subr.mxu0 %v339
      %383 = vmatpush1.msra.mxu0 %v338
      %384 = vmatprep.subr.mxu0 %v343
      %385 = vmatpush1.msra.mxu0 %v342
      %386 = vmatprep.subr.mxu0 %v347
      %387 = vmatpush1.msra.mxu0 %v346
      %388 = vmatprep.subr.mxu0 0.0
      %389 = vmatpush1.msra.mxu0 0.0
      %390 = vmatprep.subr.mxu0 0.0
      %391 = vmatpush1.msra.mxu0 0.0
      %392 = vmatprep.subr.mxu0 0.0
      %393 = vmatpush1.msra.mxu0 0.0
      %394 = vmatprep.subr.mxu0 0.0
      %395 = vmatpush1.msra.mxu0 0.0
      %396 = vmatprep.subr.mxu0 0.0
      %397 = vmatpush1.msra.mxu0 0.0
      %398 = vmatprep.subr.mxu0 0.0
      %399 = vmatpush1.msra.mxu0 0.0
      %400 = vmatprep.subr.mxu0 0.0
      %401 = vmatpush1.msra.mxu0 0.0
      %402 = vmatprep.subr.mxu0 0.0
      %403 = vmatpush1.msra.mxu0 0.0
      %404 = vmatprep.subr.mxu0 0.0
      %405 = vmatpush1.msra.mxu0 0.0
      %406 = vmatprep.subr.mxu0 0.0
      %407 = vmatpush1.msra.mxu0 0.0
      %408 = vmatprep.subr.mxu0 0.0
      %409 = vmatpush1.msra.mxu0 0.0
      %410 = vmatprep.subr.mxu0 0.0
      %411 = vmatpush1.msra.mxu0 0.0
      %412 = vmatprep.subr.mxu0 0.0
      %413 = vmatpush1.msra.mxu0 0.0
      %414 = vmatprep.subr.mxu0 0.0
      %415 = vmatpush1.msra.mxu0 0.0
      %416 = vmatprep.subr.mxu0 0.0
      %417 = vmatpush1.msra.mxu0 0.0
      %418 = vmatprep.subr.mxu0 0.0
      %419 = vmatpush1.msra.mxu0 0.0
      %420 = vmatprep.mubr.f32.mxu0 0.0
      %421 = vmatmul.mubr.f32.gmra.mrb[0].mxu0 %v285
      %v422 = vpop.f32.mrb[0].mxu0
      %v423 = vadd.f32 %v354, %v422
      %v424 = vpop.f32.mrb[0].mxu0
      %v425 = vadd.f32 %v354, %v424
      %426 = vdwg.mxu0
      %427 = vmatprep.subr.mxu0 %v289
      %428 = vmatpush1.msra.mxu0 %v288
      %429 = vmatprep.subr.mxu0 %v293
      %430 = vmatpush1.msra.mxu0 %v292
      %431 = vmatprep.subr.mxu0 %v297
      %432 = vmatpush1.msra.mxu0 %v296
      %433 = vmatprep.subr.mxu0 %v301
      %434 = vmatpush1.msra.mxu0 %v300
      %435 = vmatprep.subr.mxu0 %v305
      %436 = vmatpush1.msra.mxu0 %v304
      %437 = vmatprep.subr.mxu0 %v309
      %438 = vmatpush1.msra.mxu0 %v308
      %439 = vmatprep.subr.mxu0 %v313
      %440 = vmatpush1.msra.mxu0 %v312
      %441 = vmatprep.subr.mxu0 %v317
      %442 = vmatpush1.msra.mxu0 %v316
      %443 = vmatprep.subr.mxu0 %v321
      %444 = vmatpush1.msra.mxu0 %v320
      %445 = vmatprep.subr.mxu0 %v325
      %446 = vmatpush1.msra.mxu0 %v324
      %447 = vmatprep.subr.mxu0 %v329
      %448 = vmatpush1.msra.mxu0 %v328
      %449 = vmatprep.subr.mxu0 %v333
      %450 = vmatpush1.msra.mxu0 %v332
      %451 = vmatprep.subr.mxu0 %v337
      %452 = vmatpush1.msra.mxu0 %v336
      %453 = vmatprep.subr.mxu0 %v341
      %454 = vmatpush1.msra.mxu0 %v340
      %455 = vmatprep.subr.mxu0 %v345
      %456 = vmatpush1.msra.mxu0 %v344
      %457 = vmatprep.subr.mxu0 %v349
      %458 = vmatpush1.msra.mxu0 %v348
      %459 = vmatprep.subr.mxu0 0.0
      %460 = vmatpush1.msra.mxu0 0.0
      %461 = vmatprep.subr.mxu0 0.0
      %462 = vmatpush1.msra.mxu0 0.0
      %463 = vmatprep.subr.mxu0 0.0
      %464 = vmatpush1.msra.mxu0 0.0
      %465 = vmatprep.subr.mxu0 0.0
      %466 = vmatpush1.msra.mxu0 0.0
      %467 = vmatprep.subr.mxu0 0.0
      %468 = vmatpush1.msra.mxu0 0.0
      %469 = vmatprep.subr.mxu0 0.0
      %470 = vmatpush1.msra.mxu0 0.0
      %471 = vmatprep.subr.mxu0 0.0
      %472 = vmatpush1.msra.mxu0 0.0
      %473 = vmatprep.subr.mxu0 0.0
      %474 = vmatpush1.msra.mxu0 0.0
      %475 = vmatprep.subr.mxu0 0.0
      %476 = vmatpush1.msra.mxu0 0.0
      %477 = vmatprep.subr.mxu0 0.0
      %478 = vmatpush1.msra.mxu0 0.0
      %479 = vmatprep.subr.mxu0 0.0
      %480 = vmatpush1.msra.mxu0 0.0
      %481 = vmatprep.subr.mxu0 0.0
      %482 = vmatpush1.msra.mxu0 0.0
      %483 = vmatprep.subr.mxu0 0.0
      %484 = vmatpush1.msra.mxu0 0.0
      %485 = vmatprep.subr.mxu0 0.0
      %486 = vmatpush1.msra.mxu0 0.0
      %487 = vmatprep.subr.mxu0 0.0
      %488 = vmatpush1.msra.mxu0 0.0
      %489 = vmatprep.subr.mxu0 0.0
      %490 = vmatpush1.msra.mxu0 0.0
      %491 = vmatprep.mubr.f32.mxu0 0.0
      %492 = vmatmul.mubr.f32.gmra.mrb[0].mxu0 %v285
      %v493 = vpop.f32.mrb[0].mxu0
      %v494 = vadd.f32 %v354, %v493
      %v495 = vpop.f32.mrb[0].mxu0
      %v496 = vadd.f32 %v354, %v495
      %497 = vdwg.mxu0
      %498 = vst [vmem:[%s275] sm:$0xff] %v423
      %499 = vst [vmem:[%s275 + $0x8] sm:$0xff] %v425
      %500 = vst [vmem:[%s275 + $0x10] sm:$0xff] %v494
      %501 = vst [vmem:[%s275 + $0x18] sm:$0xff] %v496
      %p502 = scmp.eq.s32.totalorder %s22, 0
      // Predicated region
      $region33: #{decoder_conv.2} parent=31 // pred_check
        %p503 = pneg %p502
      $region34: #{decoder_conv.2} parent=31 // pred_check_branch
        %505 = sbr.rel (%p503) target = $region36
      $region35: #{decoder_conv.2} parent=31 // pred_region
        %vm506 = vcmask 7168
        %507 = vst.msk [vmem:[%s280] sm:$0xff] %vm506, 0.0
        %508 = vst.msk [vmem:[%s284] sm:$0xff] %vm506, 0.0
      $region36: #{decoder_conv.2} parent=31 // pred_fallthru
        _
      %v509 = vld [vmem:[%s280] sm:$0xff]
      %v510 = vadd.f32 %v423, %v425
      %v511 = vadd.f32 %v510, %v494
      %v512 = vadd.f32 %v511, %v496
      %513 = vadd.xlane.f32.xlu0 %v512
      %v514 = vpop.xlane.xlu0 %513
      %v515 = vadd.f32 %v509, %v514
      %vm516 = vcmask 7168
      %517 = vst.msk [vmem:[%s280] sm:$0xff] %vm516, %v515
      %v518 = vld [vmem:[%s284] sm:$0xff]
      %v519 = vmul.f32 %v423, %v423
      %v520 = vmul.f32 %v425, %v425
      %v521 = vmul.f32 %v494, %v494
      %v522 = vmul.f32 %v496, %v496
      %v523 = vadd.f32 %v519, %v520
      %v524 = vadd.f32 %v523, %v521
      %v525 = vadd.f32 %v524, %v522
      %526 = vadd.xlane.f32.xlu0 %v525
      %v527 = vpop.xlane.xlu0 %526
      %v528 = vadd.f32 %v518, %v527
      %529 = vst.msk [vmem:[%s284] sm:$0xff] %vm516, %v528
      %s530 = smul.u32 4, %s22
      %p531 = scmp.lt.s32.totalorder %s21, 1
      %s532 = scalar_select %p531, %s21, 1
      %p533 = scmp.lt.s32.totalorder %s530, 3
      %s534 = scalar_select %p533, %s530, 3
      %s535 = smul.addr %s532, 4
      %s536 = sadd.s32 %s534, %s535
      %s537 = smul.addr %s536, 8
      %s538 = scalar_lea.vmem %s3, %s537
      %p539 = scmp.lt.s32.totalorder %s21, 1
      %s540 = scalar_select %p539, %s21, 1
      %s541 = smul.addr %s540, 8
      %s542 = scalar_lea.vmem %s4, %s541
      %p543 = scmp.lt.s32.totalorder %s21, 1
      %s544 = scalar_select %p543, %s21, 1
      %s545 = smul.addr %s544, 8
      %s546 = scalar_lea.vmem %s5, %s545
      // Predicated region
      $region37: #{decoder_conv.2} parent=31 // pred_check
        %p547 = pneg %p119
      $region38: #{decoder_conv.2} parent=31 // pred_check_branch
        %549 = sbr.rel (%p547) target = $region40
      $region39: #{decoder_conv.2} parent=31 // pred_region
        %s550 = smul.u32 4, %s22
      $region40: #{decoder_conv.2} parent=31 // pred_fallthru
        _
      // Predicated region
      $region41: #{decoder_conv.2} parent=31 // pred_check
        %p551 = pneg %p145
      $region42: #{decoder_conv.2} parent=31 // pred_check_branch
        %553 = sbr.rel (%p551) target = $region44
      $region43: #{decoder_conv.2} parent=31 // pred_region
        _
      $region44: #{decoder_conv.2} parent=31 // pred_fallthru
        _
      // Predicated region
      $region45: #{decoder_conv.2} parent=31 // pred_check
        %p554 = pneg %p171
      $region46: #{decoder_conv.2} parent=31 // pred_check_branch
        %556 = sbr.rel (%p554) target = $region48
      $region47: #{decoder_conv.2} parent=31 // pred_region
        _
      $region48: #{decoder_conv.2} parent=31 // pred_fallthru
        _
    $region32: #{decoder_conv.2} parent=5 // pred_fallthru
      _
    %p557 = scmp.le.s32.totalorder 2, %s12
    // Predicated region
    $region49: #{decoder_conv.2} parent=5 // pred_check
      %p558 = pneg %p557
    $region50: #{decoder_conv.2} parent=5 // pred_check_branch
      %560 = sbr.rel (%p558) target = $region52
    $region51: #{decoder_conv.2} parent=5 // pred_region
      %s561 = ssub.s32 %s12, 2
      // Predicated region
      $region53: #{decoder_conv.2} parent=51 // pred_check
        %p562 = pneg %p125
      $region54: #{decoder_conv.2} parent=51 // pred_check_branch
        %564 = sbr.rel (%p562) target = $region56
      $region55: #{decoder_conv.2} parent=51 // pred_region
        %s565 = smul.u32 4, %s24
        %p566 = scmp.lt.s32.totalorder %s23, 1
        %s567 = scalar_select %p566, %s23, 1
        %p568 = scmp.lt.s32.totalorder %s565, 3
        %s569 = scalar_select %p568, %s565, 3
        %s570 = smul.addr %s567, 4
        %s571 = sadd.s32 %s569, %s570
        %s572 = smul.addr %s571, 8
        %s573 = scalar_lea.vmem %s3, %s572
      $region56: #{decoder_conv.2} parent=51 // pred_fallthru
        _
      // Predicated region
      $region57: #{decoder_conv.2} parent=51 // pred_check
        %p574 = pneg %p151
      $region58: #{decoder_conv.2} parent=51 // pred_check_branch
        %576 = sbr.rel (%p574) target = $region60
      $region59: #{decoder_conv.2} parent=51 // pred_region
        %p577 = scmp.lt.s32.totalorder %s23, 1
        %s578 = scalar_select %p577, %s23, 1
        %s579 = smul.addr %s578, 8
        %s580 = scalar_lea.vmem %s4, %s579
      $region60: #{decoder_conv.2} parent=51 // pred_fallthru
        _
      // Predicated region
      $region61: #{decoder_conv.2} parent=51 // pred_check
        %p581 = pneg %p177
      $region62: #{decoder_conv.2} parent=51 // pred_check_branch
        %583 = sbr.rel (%p581) target = $region64
      $region63: #{decoder_conv.2} parent=51 // pred_region
        %p584 = scmp.lt.s32.totalorder %s23, 1
        %s585 = scalar_select %p584, %s23, 1
        %s586 = smul.addr %s585, 8
        %s587 = scalar_lea.vmem %s5, %s586
      $region64: #{decoder_conv.2} parent=51 // pred_fallthru
        _
    $region52: #{decoder_conv.2} parent=5 // pred_fallthru
      _
  $region6: #{decoder_conv.2} parent=0 // loop_footer
    %s16 = sadd.s32 1, %s12
  $region7: #{decoder_conv.2} parent=0 // loop_footer_branch
    %11 = sbr.rel target = $region3
  $region8: #{decoder_conv.2} parent=0 // loop_exit
    _

</llo_original>
